<compile_context>
chip_gen: v7x
topology: tpu7x:2x2x1
jax: 0.10.0
libtpu: 0.0.40
codegen_flags: <defaults>
</compile_context>

<pallas_src>
import math

import jax
import jax.numpy as jnp
import numpy as np
from jax.experimental import pallas as pl
from jax.experimental.pallas import tpu as pltpu


def _round_up(x, m):
    return ((x + m - 1) // m) * m


# ---------------------------------------------------------------------------
# Kernel
# ---------------------------------------------------------------------------
def _linear_kernel(x_ref, w_ref, b_ref, o_ref):
    # x_ref: (tm, tk), w_ref: (tk, tn), b_ref: (1, tn), o_ref: (tm, tn) f32.
    # o_ref's block index is constant over the K grid axis (k innermost,
    # "arbitrary"), so it stays VMEM-resident and serves as the accumulator.
    @pl.when(pl.program_id(2) == 0)
    def _init():
        o_ref[...] = jnp.broadcast_to(b_ref[...], o_ref.shape).astype(o_ref.dtype)

    o_ref[...] += jnp.dot(
        x_ref[...], w_ref[...], preferred_element_type=jnp.float32
    )


# ---------------------------------------------------------------------------
# Tiling plan
# ---------------------------------------------------------------------------
_TM_CAP = 512   # multiple of 256
_TN_CAP = 512   # multiple of 256
_TK_CAP = 1024  # multiple of 256


def _plan_kn(in_size, out_size):
    """K/N tile sizes + padded K/N. Independent of batch (weight prep uses it)."""
    tn = min(_TN_CAP, _round_up(out_size, 128))
    tk = min(_TK_CAP, _round_up(in_size, 128))
    K = _round_up(in_size, tk)
    N = _round_up(out_size, tn)
    return tn, tk, K, N


def _plan_m(batch, sublane):
    """M tile: cover the whole batch up to the cap so W streams fewer times."""
    tm = min(_TM_CAP, _round_up(batch, sublane))
    M = _round_up(batch, tm)
    return tm, M


def _maybe_split_for_megacore(tm, tn, M, N):
    """v7x has 2 TensorCores sharded over the 'parallel' grid axes; make sure
    large single-program problems expose >= 2 (i, j) programs.  Tiny problems
    are left alone so single-TC v5e/v6e don't pay extra grid-step overhead."""
    if (M // tm) * (N // tn) > 1:
        return tm, tn
    if M * N < 512 * 256:          # not enough work to be worth splitting
        return tm, tn
    if N >= 256 and (N // 2) % 128 == 0:
        return tm, N // 2
    if M >= 16 and (M // 2) % 8 == 0:
        return M // 2, tn
    return tm, tn


# ---------------------------------------------------------------------------
# Wrappers
# ---------------------------------------------------------------------------
def prepare_linear_params(weight, bias, compute_dtype=jnp.float32):
    """One-time prep (hoist out of the hot path / cache across calls):
    transpose weight to (in, out), zero-pad K/N to tile multiples, cast.
    Bias stays float32 (it is added in f32)."""
    out_size, in_size = weight.shape
    _, _, K, N = _plan_kn(in_size, out_size)
    w_p = jnp.pad(weight.T, ((0, K - in_size), (0, N - out_size))).astype(compute_dtype)
    b_p = jnp.pad(bias.reshape(1, -1), ((0, 0), (0, N - out_size))).astype(jnp.float32)
    return w_p, b_p, (in_size, out_size)


def single_layer_linear_prepared(x, w_p, b_p, dims, *, compute_dtype=None):
    """y = x @ W.T + b with W already prepared by prepare_linear_params."""
    in_size, out_size = dims
    batch = x.shape[0]
    assert x.shape[1] == in_size
    if compute_dtype is None:
        compute_dtype = w_p.dtype
    itemsize = np.dtype(compute_dtype).itemsize
    sublane = 16 if itemsize == 2 else 8  # bf16 packs 2 rows per sublane

    tn, tk, K, N = _plan_kn(in_size, out_size)
    assert (K, N) == w_p.shape
    tm, M = _plan_m(batch, sublane)
    tm, tn = _maybe_split_for_megacore(tm, tn, M, N)

    # Zero padding is exact: padded rows/cols contribute 0 to the dot product
    # and are sliced off below.
    x_p = jnp.pad(x, ((0, M - batch), (0, K - in_size))).astype(compute_dtype)

    grid = (M // tm, N // tn, K // tk)

    cost = pl.CostEstimate(
        flops=2 * M * N * K,
        transcendentals=0,
        bytes_accessed=(M * K + K * N) * itemsize + (M * N + N) * 4,
    )

    out_padded = pl.pallas_call(
        _linear_kernel,
        out_shape=jax.ShapeDtypeStruct((M, N), jnp.float32),
        grid_spec=pltpu.PrefetchScalarGridSpec(
            num_scalar_prefetch=0,
            grid=grid,
            in_specs=[
                pl.BlockSpec((tm, tk), lambda i, j, k: (i, k)),
                pl.BlockSpec((tk, tn), lambda i, j, k: (k, j)),
                pl.BlockSpec((1, tn), lambda i, j, k: (0, j)),
            ],
            out_specs=pl.BlockSpec((tm, tn), lambda i, j, k: (i, j)),
        ),
        compiler_params=pltpu.CompilerParams(
            # M, N parallel (shards across v7x's 2 TCs); K is the reduction
            # and must stay innermost/arbitrary (output accumulates over it).
            dimension_semantics=("parallel", "parallel", "arbitrary"),
        ),
        cost_estimate=cost,
    )(x_p, w_p, b_p)

    return out_padded[:batch, :out_size].astype(x.dtype)


def single_layer_linear(x, weight, bias, *, compute_dtype=jnp.float32):
    """Convenience wrapper: x @ weight.T + bias (PyTorch nn.Linear layout)."""
    w_p, b_p, dims = prepare_linear_params(weight, bias, compute_dtype)
    return single_layer_linear_prepared(x, w_p, b_p, dims)


def init_linear_params(key, input_size, output_size):
    """torch.nn.Linear default init: U(-1/sqrt(in), 1/sqrt(in)) for W and b."""
    k_w, k_b = jax.random.split(key)
    bound = 1.0 / math.sqrt(input_size)
    weight = jax.random.uniform(
        k_w, (output_size, input_size), jnp.float32, -bound, bound)
    bias = jax.random.uniform(k_b, (output_size,), jnp.float32, -bound, bound)
    return weight, bias


if __name__ == "__main__":
    key = jax.random.PRNGKey(0)
    k_x1, k_p1, k_x2, k_p2, k_x3, k_p3 = jax.random.split(key, 6)

    apply = jax.jit(single_layer_linear_prepared, static_argnums=(3,))

    # --- Check 1: small shapes implied by the module (single small Linear) ---
    batch, input_size, output_size = 8, 32, 16
    x1 = jax.random.normal(k_x1, (batch, input_size), jnp.float32)
    w1, b1 = init_linear_params(k_p1, input_size, output_size)
    w1_p, b1_p, dims1 = prepare_linear_params(w1, b1)      # hoisted prep
    y1 = jax.block_until_ready(apply(x1, w1_p, b1_p, dims1))
    y1_ref = x1 @ w1.T + b1
    assert y1.shape == (batch, output_size)
    assert jnp.allclose(y1, y1_ref, atol=1e-5, rtol=1e-5)

    # --- Check 2: multi-K-tile grid (K > tk_cap), padded M/N ---
    b2, in2, out2 = 300, 1100, 200
    x2 = jax.random.normal(k_x2, (b2, in2), jnp.float32)
    w2, bi2 = init_linear_params(k_p2, in2, out2)
    w2_p, b2_p, dims2 = prepare_linear_params(w2, bi2)
    y2 = jax.block_until_ready(apply(x2, w2_p, b2_p, dims2))
    y2_ref = x2 @ w2.T + bi2
    assert y2.shape == (b2, out2)
    assert jnp.allclose(y2, y2_ref, atol=1e-3, rtol=1e-3)

    # --- Check 3: multi M/N tile grid (2 x 2 parallel programs) ---
    b3, in3, out3 = 600, 256, 640
    x3 = jax.random.normal(k_x3, (b3, in3), jnp.float32)
    w3, bi3 = init_linear_params(k_p3, in3, out3)
    w3_p, b3_p, dims3 = prepare_linear_params(w3, bi3)
    y3 = jax.block_until_ready(apply(x3, w3_p, b3_p, dims3))
    y3_ref = x3 @ w3.T + bi3
    assert y3.shape == (b3, out3)
    assert jnp.allclose(y3, y3_ref, atol=1e-3, rtol=1e-3)

    print("KERNEL_OK")
</pallas_src>

<mosaic_0001>
module attributes {stable_mosaic.version = 11 : i64} {
  func.func @_linear_kernel(%arg0: i32, %arg1: i32, %arg2: i32, %arg3: memref<8x128xf32, #tpu.memory_space<vmem>>, %arg4: memref<128x128xf32, #tpu.memory_space<vmem>>, %arg5: memref<1x128xf32, #tpu.memory_space<vmem>>, %arg6: memref<8x128xf32, #tpu.memory_space<vmem>>) attributes {dimension_semantics = [#tpu.dimension_semantics<parallel>, #tpu.dimension_semantics<parallel>, #tpu.dimension_semantics<arbitrary>], iteration_bounds = array<i64: 1, 1, 1>, scalar_prefetch = 0 : i64, scratch_operands = 0 : i64, tpu.core_type = #tpu.core_type<tc>, window_params = [{transform_indices = @transform_0, window_bounds = array<i64: 8, 128>}, {transform_indices = @transform_1, window_bounds = array<i64: 128, 128>}, {transform_indices = @transform_2, window_bounds = array<i64: 1, 128>}, {transform_indices = @transform_3, window_bounds = array<i64: 8, 128>}]} {
    %c0_i32 = arith.constant 0 : i32
    %0 = arith.cmpi eq, %arg2, %c0_i32 : i32
    %1 = arith.extui %0 : i1 to i32
    %c0_i32_0 = arith.constant 0 : i32
    %2 = arith.cmpi ne, %1, %c0_i32_0 : i32
    scf.if %2 {
      %c0_8 = arith.constant 0 : index
      %c0_9 = arith.constant 0 : index
      %9 = vector.load %arg5[%c0_8, %c0_9] : memref<1x128xf32, #tpu.memory_space<vmem>>, vector<1x128xf32>
      %10 = vector.shape_cast %9 : vector<1x128xf32> to vector<1x128xf32>
      %11 = vector.broadcast %10 : vector<1x128xf32> to vector<8x128xf32>
      %c0_10 = arith.constant 0 : index
      %c0_11 = arith.constant 0 : index
      %12 = vector.load %arg6[%c0_10, %c0_11] : memref<8x128xf32, #tpu.memory_space<vmem>>, vector<8x128xf32>
      tpu.vector_store %arg6[%c0_10, %c0_11], %11 {strides = array<i32>} : memref<8x128xf32, #tpu.memory_space<vmem>>, vector<8x128xf32>,
    } else {
    }
    %c0 = arith.constant 0 : index
    %c0_1 = arith.constant 0 : index
    %3 = vector.load %arg6[%c0, %c0_1] : memref<8x128xf32, #tpu.memory_space<vmem>>, vector<8x128xf32>
    %c0_2 = arith.constant 0 : index
    %c0_3 = arith.constant 0 : index
    %4 = vector.load %arg3[%c0_2, %c0_3] : memref<8x128xf32, #tpu.memory_space<vmem>>, vector<8x128xf32>
    %c0_4 = arith.constant 0 : index
    %c0_5 = arith.constant 0 : index
    %5 = vector.load %arg4[%c0_4, %c0_5] : memref<128x128xf32, #tpu.memory_space<vmem>>, vector<128x128xf32>
    %cst = arith.constant dense<0.000000e+00> : vector<8x128xf32>
    %6 = tpu.matmul %4, %5, %cst {dimension_numbers = #tpu.dot_dimension_numbers<[1], [0], [0], [1], [0, 0, 1, 1], [], []>} : vector<8x128xf32>, vector<128x128xf32>, vector<8x128xf32> -> vector<8x128xf32>
    %7 = arith.addf %3, %6 : vector<8x128xf32>
    %c0_6 = arith.constant 0 : index
    %c0_7 = arith.constant 0 : index
    %8 = vector.load %arg6[%c0_6, %c0_7] : memref<8x128xf32, #tpu.memory_space<vmem>>, vector<8x128xf32>
    tpu.vector_store %arg6[%c0_6, %c0_7], %7 {strides = array<i32>} : memref<8x128xf32, #tpu.memory_space<vmem>>, vector<8x128xf32>,
    return
  }
  func.func @transform_0(%arg0: i32, %arg1: i32, %arg2: i32) -> (i32, i32) {
    %c0_i32 = arith.constant 0 : i32
    return %arg0, %arg2 : i32, i32
  }
  func.func @transform_1(%arg0: i32, %arg1: i32, %arg2: i32) -> (i32, i32) {
    %c0_i32 = arith.constant 0 : i32
    return %arg2, %arg1 : i32, i32
  }
  func.func @transform_2(%arg0: i32, %arg1: i32, %arg2: i32) -> (i32, i32) {
    %c0_i32 = arith.constant 0 : i32
    %c0_i32_0 = arith.constant 0 : i32
    return %c0_i32, %arg1 : i32, i32
  }
  func.func @transform_3(%arg0: i32, %arg1: i32, %arg2: i32) -> (i32, i32) {
    %c0_i32 = arith.constant 0 : i32
    return %arg0, %arg1 : i32, i32
  }
}

</mosaic_0001>

<llo_original>
// kernel: single_layer_linear_prepared.1
$region0: #{single_layer_linear_prepared.1}
  #allocation0 [shape = 'u32[]', space=smem, size = 0x4, offset = 0x4, fixed_abs, tag = 'smem constant byte address 0x4 - core index']
  #allocation1 [shape = 'u32[144,128]{1,0:T(1,128)}', space=vmem, size = 0x12000, scoped, tag = 'internal scratch']
  %s0 = inlined_call_operand.vmem [shape: f32[8,128], index: 0, kind: input, shape index: {}]
  %s1 = inlined_call_operand.hbm [shape: f32[128,128], index: 1, kind: input, shape index: {}]
  %s2 = inlined_call_operand.vmem [shape: f32[1,128], index: 2, kind: input, shape index: {}]
  %s3 = inlined_call_operand.hbm [shape: f32[8,128], index: 3, kind: output, shape index: {}]
  %s4 = sld [smem:[#allocation0]]
  $region30: #{single_layer_linear_prepared.1} parent=0
    _
  %s6 = ssub.s32 1, %s4
  %s7 = scalar_select 0, %s6, %s4
  $region1: #{single_layer_linear_prepared.1} parent=0
    #allocation2 [shape = 'u8[65536]{0}', space=vmem, size = 0x10000, scoped, tag = 'input window, operand 1, single buffered']
    #allocation3 [shape = 's32[1]{0}', space=sflag, size = 0x4, scoped, tag = 'scoped memory for single_layer_linear_prepared.1']
    #allocation4 [shape = 's32[1]{0}', space=sflag, size = 0x4, scoped, tag = 'scoped memory for single_layer_linear_prepared.1']
    #allocation5 [shape = 'u8[4096]{0}', space=vmem, size = 0x1000, scoped, tag = 'output window, operand 0, single buffered']
    %8 = vsyncpa [#allocation3], 0
    %9 = vsyncpa [#allocation4], 0
    // Predicated region
    $region2: #{single_layer_linear_prepared.1} parent=1 // pred_check
      _
    $region3: #{single_layer_linear_prepared.1} parent=1 // pred_check_branch
      %11 = sbr.rel (0) target = $region5
    $region4: #{single_layer_linear_prepared.1} parent=1 // pred_region
      _
    $region5: #{single_layer_linear_prepared.1} parent=1 // pred_fallthru
      _
    // Predicated region
    $region6: #{single_layer_linear_prepared.1} parent=1 // pred_check
      _
    $region7: #{single_layer_linear_prepared.1} parent=1 // pred_check_branch
      %13 = sbr.rel (0) target = $region9
    $region8: #{single_layer_linear_prepared.1} parent=1 // pred_region
      %s15 = ssub.s32 2048, 2048
      %16 = vsyncadd [#allocation3], %s15
      %s17 = sshll.u32 [#allocation2], 4
      %s18 = int_to_ptr.vmem [resolvable:$true] %s17
      %23 = dma.hbm_to_vmem [thread:$0]  %s1, 2048, %s18, [#allocation3], 128, 128, 8
    $region9: #{single_layer_linear_prepared.1} parent=1 // pred_fallthru
      _
    // Predicated region
    $region10: #{single_layer_linear_prepared.1} parent=1 // pred_check
      _
    $region11: #{single_layer_linear_prepared.1} parent=1 // pred_check_branch
      %25 = sbr.rel (0) target = $region13
    $region12: #{single_layer_linear_prepared.1} parent=1 // pred_region
      _
    $region13: #{single_layer_linear_prepared.1} parent=1 // pred_fallthru
      _
    // Predicated region
    $region14: #{single_layer_linear_prepared.1} parent=1 // pred_check
      _
    $region15: #{single_layer_linear_prepared.1} parent=1 // pred_check_branch
      %27 = sbr.rel (0) target = $region17
    $region16: #{single_layer_linear_prepared.1} parent=1 // pred_region
      %28 = dma.done [#allocation3], 2048
    $region17: #{single_layer_linear_prepared.1} parent=1 // pred_fallthru
      _
    %p29 = scmp.eq.s32.totalorder 0, 0
    // Predicated region
    $region18: #{single_layer_linear_prepared.1} parent=1 // pred_check
      %p30 = pneg %p29
    $region19: #{single_layer_linear_prepared.1} parent=1 // pred_check_branch
      %32 = sbr.rel (%p30) target = $region21
    $region20: #{single_layer_linear_prepared.1} parent=1 // pred_region
      %v33 = vld [vmem:[%s2] sm:$0x1]
      %v35 = vlaneseq
      %v36 = vshrl.u32 %v35, 7
      %v37 = vsub.s32 0, %v36
      %v38 = vrot.slane %v33, %v37
      %40 = vst [vmem:[#allocation5] sm:$0xff] %v38
    $region21: #{single_layer_linear_prepared.1} parent=1 // pred_fallthru
      _
    %v41 = vld [vmem:[#allocation5] sm:$0xff]
    %v42 = vld [vmem:[%s0] sm:$0xff]
    %v43 = vld [vmem:[#allocation2] sm:$0xff]
    %v44 = vld [vmem:[#allocation2 + $0x8] sm:$0xff]
    %v45 = vld [vmem:[#allocation2 + $0x10] sm:$0xff]
    %v46 = vld [vmem:[#allocation2 + $0x18] sm:$0xff]
    %v47 = vld [vmem:[#allocation2 + $0x20] sm:$0xff]
    %v48 = vld [vmem:[#allocation2 + $0x28] sm:$0xff]
    %v49 = vld [vmem:[#allocation2 + $0x30] sm:$0xff]
    %v50 = vld [vmem:[#allocation2 + $0x38] sm:$0xff]
    %v51 = vld [vmem:[#allocation2 + $0x40] sm:$0xff]
    %v52 = vld [vmem:[#allocation2 + $0x48] sm:$0xff]
    %v53 = vld [vmem:[#allocation2 + $0x50] sm:$0xff]
    %v54 = vld [vmem:[#allocation2 + $0x58] sm:$0xff]
    %v55 = vld [vmem:[#allocation2 + $0x60] sm:$0xff]
    %v56 = vld [vmem:[#allocation2 + $0x68] sm:$0xff]
    %v57 = vld [vmem:[#allocation2 + $0x70] sm:$0xff]
    %v58 = vld [vmem:[#allocation2 + $0x78] sm:$0xff]
    %59 = vmatprep.subr.mxu0 0.0
    %60 = vmatpush1.msra.mxu0 %v43
    %61 = vmatprep.subr.mxu0 0.0
    %62 = vmatpush1.msra.mxu0 %v44
    %63 = vmatprep.subr.mxu0 0.0
    %64 = vmatpush1.msra.mxu0 %v45
    %65 = vmatprep.subr.mxu0 0.0
    %66 = vmatpush1.msra.mxu0 %v46
    %67 = vmatprep.subr.mxu0 0.0
    %68 = vmatpush1.msra.mxu0 %v47
    %69 = vmatprep.subr.mxu0 0.0
    %70 = vmatpush1.msra.mxu0 %v48
    %71 = vmatprep.subr.mxu0 0.0
    %72 = vmatpush1.msra.mxu0 %v49
    %73 = vmatprep.subr.mxu0 0.0
    %74 = vmatpush1.msra.mxu0 %v50
    %75 = vmatprep.subr.mxu0 0.0
    %76 = vmatpush1.msra.mxu0 %v51
    %77 = vmatprep.subr.mxu0 0.0
    %78 = vmatpush1.msra.mxu0 %v52
    %79 = vmatprep.subr.mxu0 0.0
    %80 = vmatpush1.msra.mxu0 %v53
    %81 = vmatprep.subr.mxu0 0.0
    %82 = vmatpush1.msra.mxu0 %v54
    %83 = vmatprep.subr.mxu0 0.0
    %84 = vmatpush1.msra.mxu0 %v55
    %85 = vmatprep.subr.mxu0 0.0
    %86 = vmatpush1.msra.mxu0 %v56
    %87 = vmatprep.subr.mxu0 0.0
    %88 = vmatpush1.msra.mxu0 %v57
    %89 = vmatprep.subr.mxu0 0.0
    %90 = vmatpush1.msra.mxu0 %v58
    %91 = vmatprep.subr.mxu0 0.0
    %92 = vmatpush1.msra.mxu0 0.0
    %93 = vmatprep.subr.mxu0 0.0
    %94 = vmatpush1.msra.mxu0 0.0
    %95 = vmatprep.subr.mxu0 0.0
    %96 = vmatpush1.msra.mxu0 0.0
    %97 = vmatprep.subr.mxu0 0.0
    %98 = vmatpush1.msra.mxu0 0.0
    %99 = vmatprep.subr.mxu0 0.0
    %100 = vmatpush1.msra.mxu0 0.0
    %101 = vmatprep.subr.mxu0 0.0
    %102 = vmatpush1.msra.mxu0 0.0
    %103 = vmatprep.subr.mxu0 0.0
    %104 = vmatpush1.msra.mxu0 0.0
    %105 = vmatprep.subr.mxu0 0.0
    %106 = vmatpush1.msra.mxu0 0.0
    %107 = vmatprep.subr.mxu0 0.0
    %108 = vmatpush1.msra.mxu0 0.0
    %109 = vmatprep.subr.mxu0 0.0
    %110 = vmatpush1.msra.mxu0 0.0
    %111 = vmatprep.subr.mxu0 0.0
    %112 = vmatpush1.msra.mxu0 0.0
    %113 = vmatprep.subr.mxu0 0.0
    %114 = vmatpush1.msra.mxu0 0.0
    %115 = vmatprep.subr.mxu0 0.0
    %116 = vmatpush1.msra.mxu0 0.0
    %117 = vmatprep.subr.mxu0 0.0
    %118 = vmatpush1.msra.mxu0 0.0
    %119 = vmatprep.subr.mxu0 0.0
    %120 = vmatpush1.msra.mxu0 0.0
    %121 = vmatprep.subr.mxu0 0.0
    %122 = vmatpush1.msra.mxu0 0.0
    %123 = vmatprep.mubr.f32.mxu0 0.0
    %124 = vmatmul.mubr.f32.gmra.mrb[0].mxu0 %v42
    %v125 = vpop.f32.mrb[0].mxu0
    %v126 = vadd.f32 0.0, %v125
    %v127 = vpop.f32.mrb[0].mxu0
    %128 = vdwg.mxu0
    %v129 = vadd.f32 %v41, %v126
    %130 = vst [vmem:[#allocation5] sm:$0xff] %v129
    // Predicated region
    $region22: #{single_layer_linear_prepared.1} parent=1 // pred_check
      _
    $region23: #{single_layer_linear_prepared.1} parent=1 // pred_check_branch
      %132 = sbr.rel (0) target = $region25
    $region24: #{single_layer_linear_prepared.1} parent=1 // pred_region
      %s134 = ssub.s32 128, 128
      %135 = vsyncadd [#allocation4], %s134
      %s137 = sshll.u32 [#allocation5], 4
      %s138 = int_to_ptr.vmem [resolvable:$true] %s137
      %140 = dma.vmem_to_hbm [thread:$0]  %s138, 128, %s3, [#allocation4]
    $region25: #{single_layer_linear_prepared.1} parent=1 // pred_fallthru
      _
    // Predicated region
    $region26: #{single_layer_linear_prepared.1} parent=1 // pred_check
      _
    $region27: #{single_layer_linear_prepared.1} parent=1 // pred_check_branch
      %142 = sbr.rel (0) target = $region29
    $region28: #{single_layer_linear_prepared.1} parent=1 // pred_region
      %143 = dma.done [#allocation4], 128
    $region29: #{single_layer_linear_prepared.1} parent=1 // pred_fallthru
      _
    %144 = vsyncpa [#allocation3], 1
    %145 = vsyncpa [#allocation4], 1

</llo_original>
